<compile_context>
chip_gen: v6e
topology: v6e:2x2x1
jax: 0.10.0
libtpu: 0.0.40
codegen_flags: <defaults>
</compile_context>

<pallas_src>
import jax
import jax.numpy as jnp
from jax.experimental import pallas as pl
from jax.experimental.pallas import tpu as pltpu


def _round_up(x, m):
    return ((x + m - 1) // m) * m


def _cdiv(a, b):
    return (a + b - 1) // b


# ---------------------------------------------------------------------------
# Pallas kernel: accumulate the "all-negatives" focal term over [B*Q, C] logits.
#     loss0(x) = sigmoid(x)^2 * BCE_with_logits(x, target=0)     (gamma = 2)
# alpha scaling is applied outside on the final scalar.
# ---------------------------------------------------------------------------
def _make_focal_neg_kernel(rows_total, tile_r, n_inner, needs_mask):
    def kernel(x_ref, o_ref):
        @pl.when(pl.program_id(1) == 0)
        def _():
            o_ref[...] = jnp.zeros_like(o_ref)

        x = x_ref[...].astype(jnp.float32)              # (tile_r, C)
        e = jnp.exp(-jnp.abs(x))                        # single exp, reused below
        ce0 = jnp.maximum(x, 0.0) + jnp.log1p(e)        # stable BCE-with-logits vs 0
        inv = pl.reciprocal(1.0 + e, approx=True)       # EUP vrcp (no full divide)
        p = jnp.where(x >= 0.0, inv, e * inv)           # sigmoid(x) from the same exp
        loss = (p * p) * ce0                            # gamma == 2 -> explicit square

        if needs_mask:
            # Mask rows past the true row count (ragged last block / clamped blocks).
            row0 = (pl.program_id(0) * n_inner + pl.program_id(1)) * tile_r
            rid = row0 + jax.lax.broadcasted_iota(jnp.int32, (tile_r, 1), 0)
            loss = jnp.where(rid < rows_total, loss, 0.0)

        # Pure-VPU pairwise add tree: (tile_r, C) -> (8, C) via sublane-aligned slices.
        parts = [loss[k * 8:(k + 1) * 8, :] for k in range(tile_r // 8)]
        while len(parts) > 1:
            nxt = [a + b for a, b in zip(parts[0::2], parts[1::2])]
            if len(parts) % 2:
                nxt.append(parts[-1])
            parts = nxt
        o_ref[...] += parts[0]

    return kernel


def _focal_negative_sum(logits, *, max_tile_rows=1024, n_par=None):
    """Sum over ALL elements of sigmoid(x)^2 * BCE(x, 0), computed in a Pallas kernel.

    Streams the logits unpadded as [B*Q, C] (single HBM read, no pad/reshape copy).
    """
    C = logits.shape[-1]
    x2d = logits.reshape(-1, C)            # free bitcast of contiguous [B, Q, C]
    R = x2d.shape[0]

    if n_par is None:
        n_par = 2 if R >= 4096 else 1      # partition axis (multi-TensorCore chips)
    rows_per_part = _cdiv(R, n_par)
    tile_r = min(_round_up(max(int(max_tile_rows), 16), 16),
                 _round_up(rows_per_part, 16))
    n_inner = _cdiv(rows_per_part, tile_r)
    needs_mask = (n_par * n_inner * tile_r) != R

    kernel = _make_focal_neg_kernel(R, tile_r, n_inner, needs_mask)
    partials = pl.pallas_call(
        kernel,
        out_shape=jax.ShapeDtypeStruct((n_par * 8, C), jnp.float32),
        grid=(n_par, n_inner),
        in_specs=[pl.BlockSpec((tile_r, C), lambda p, i: (p * n_inner + i, 0))],
        out_specs=pl.BlockSpec((8, C), lambda p, i: (p, 0)),
        compiler_params=pltpu.CompilerParams(
            # TODO(synk): on v7x, pltpu.CORE_PARALLEL on the first axis would make the
            # 2-TensorCore split explicit; kept as the portable "parallel" here.
            dimension_semantics=("parallel", "arbitrary")),
    )(x2d)
    # Tiny epilogue reduction ((n_par*8, C) f32) in plain JAX.
    return jnp.sum(partials)


# ---------------------------------------------------------------------------
# Module port (index glue + K-element positive correction in JAX, bulk in Pallas).
# ---------------------------------------------------------------------------
def _get_src_permutation_idx(indices):
    batch_idx = jnp.concatenate(
        [jnp.full_like(src, i) for i, (src, _) in enumerate(indices)]
    )
    src_idx = jnp.concatenate([src for src, _ in indices])
    return batch_idx, src_idx


class ClassificationLoss:
    def __init__(self, focal_alpha):
        self.focal_alpha = focal_alpha
        self.target_classes = None
        self.src_logits = None

    def __call__(self, outputs, targets, indices, num_boxes):
        assert "pred_logits" in outputs
        src_logits = outputs["pred_logits"]  # [B, Q, C]

        batch_idx, src_idx = _get_src_permutation_idx(indices)
        target_classes_o = jnp.concatenate(
            [t["labels"][J] for t, (_, J) in zip(targets, indices)]
        )
        self.target_classes = target_classes_o
        # TODO(synk): the 'topk_indexes' gather branch of the reference forward is not implemented.
        self.src_logits = src_logits[batch_idx, src_idx]  # [K, C]

        alpha = float(self.focal_alpha)
        scale_pos = alpha if alpha >= 0 else 1.0
        scale_neg = (1.0 - alpha) if alpha >= 0 else 1.0

        # Bulk term: every (b, q, c) position treated as a negative — Pallas kernel,
        # single HBM stream of the (unpadded) logits.  gamma is statically 2.0.
        neg_sum = scale_neg * _focal_negative_sum(src_logits)

        # Exact correction for the K matched positives (K << B*Q*C), plain JAX.
        # (Assumes Hungarian-matched indices: no duplicate (batch, query) pairs.)
        k = target_classes_o.shape[0]
        x_pos = self.src_logits[jnp.arange(k), target_classes_o].astype(jnp.float32)
        e = jnp.exp(-jnp.abs(x_pos))
        ce0 = jnp.maximum(x_pos, 0.0) + jnp.log1p(e)  # BCE(x, 0)
        ce1 = ce0 - x_pos                             # BCE(x, 1)
        inv = 1.0 / (1.0 + e)
        p = jnp.where(x_pos >= 0.0, inv, e * inv)     # sigmoid(x)
        correction = jnp.sum(
            scale_pos * (1.0 - p) * (1.0 - p) * ce1 - scale_neg * (p * p) * ce0
        )

        loss_ce = (neg_sum + correction) / num_boxes
        return {"loss_ce": loss_ce}


# ---------------------------------------------------------------------------
# Pure-JAX reference (dense one-hot) for correctness checks.
# ---------------------------------------------------------------------------
def _ref_focal_sum(logits, targets, alpha, gamma=2.0):
    x = logits.astype(jnp.float32)
    t = targets.astype(jnp.float32)
    p = jax.nn.sigmoid(x)
    ce = jnp.maximum(x, 0.0) - x * t + jnp.log1p(jnp.exp(-jnp.abs(x)))
    p_t = p * t + (1.0 - p) * (1.0 - t)
    loss = ce * (1.0 - p_t) ** gamma
    alpha_t = alpha * t + (1.0 - alpha) * (1.0 - t)
    return jnp.sum(alpha_t * loss)


if __name__ == "__main__":
    key = jax.random.PRNGKey(0)
    B, Q, C = 2, 16, 3  # small shapes: 2 batches, 16 queries, 3 classes

    k_logits, k_aux = jax.random.split(key)
    pred_logits = jax.random.normal(k_logits, (B, Q, C), dtype=jnp.float32)

    outputs = {"pred_logits": pred_logits}
    # Matched (query, target) index pairs per batch element.
    indices = [
        (jnp.array([1, 5, 7], dtype=jnp.int32), jnp.array([0, 1, 2], dtype=jnp.int32)),
        (jnp.array([0, 3], dtype=jnp.int32), jnp.array([1, 0], dtype=jnp.int32)),
    ]
    targets = [
        {"labels": jnp.array([2, 0, 1], dtype=jnp.int32)},
        {"labels": jnp.array([1, 2], dtype=jnp.int32)},
    ]
    num_boxes = 5.0

    loss_mod = ClassificationLoss(focal_alpha=0.25)
    losses = loss_mod(outputs, targets, indices, num_boxes)
    loss_ce = jax.block_until_ready(losses["loss_ce"])

    # Full-module cross-check against the dense pure-JAX reference.
    # (Tolerance covers the approx EUP reciprocal used in the kernel.)
    batch_idx, src_idx = _get_src_permutation_idx(indices)
    tgt_o = jnp.concatenate([t["labels"][J] for t, (_, J) in zip(targets, indices)])
    onehot = jnp.zeros_like(pred_logits).at[batch_idx, src_idx, tgt_o].set(1.0)
    ref = _ref_focal_sum(pred_logits, onehot, alpha=0.25) / num_boxes
    assert jnp.allclose(loss_ce, ref, rtol=5e-3, atol=1e-2), (loss_ce, ref)

    # Extra check: multi-tile, 2-partition grid with a ragged (masked) last block.
    x_big = jax.random.normal(k_aux, (4, 500, 3), dtype=jnp.float32)  # 2000 rows
    got = jax.block_until_ready(_focal_negative_sum(x_big, max_tile_rows=64, n_par=2))
    p_ref = jax.nn.sigmoid(x_big)
    ce0_ref = jnp.maximum(x_big, 0.0) + jnp.log1p(jnp.exp(-jnp.abs(x_big)))
    want = jnp.sum(p_ref * p_ref * ce0_ref)
    assert jnp.allclose(got, want, rtol=5e-3, atol=0.5), (got, want)

    print("KERNEL_OK")
</pallas_src>

<mosaic_0001>
module attributes {stable_mosaic.version = 11 : i64} {
  func.func @kernel(%arg0: i32, %arg1: i32, %arg2: memref<32x3xf32, #tpu.memory_space<vmem>>, %arg3: memref<8x3xf32, #tpu.memory_space<vmem>>) attributes {dimension_semantics = [#tpu.dimension_semantics<parallel>, #tpu.dimension_semantics<arbitrary>], iteration_bounds = array<i64: 1, 1>, scalar_prefetch = 0 : i64, scratch_operands = 0 : i64, tpu.core_type = #tpu.core_type<tc>, window_params = [{transform_indices = @transform_0, window_bounds = array<i64: 32, 3>}, {transform_indices = @transform_1, window_bounds = array<i64: 8, 3>}]} {
    %c0_i32 = arith.constant 0 : i32
    %0 = arith.cmpi eq, %arg1, %c0_i32 : i32
    %1 = arith.extui %0 : i1 to i32
    %c0_i32_0 = arith.constant 0 : i32
    %2 = arith.cmpi ne, %1, %c0_i32_0 : i32
    scf.if %2 {
      %cst_9 = arith.constant 0.000000e+00 : f32
      %31 = vector.broadcast %cst_9 : f32 to vector<8x3xf32>
      %c0_10 = arith.constant 0 : index
      %c0_11 = arith.constant 0 : index
      %32 = vector.load %arg3[%c0_10, %c0_11] : memref<8x3xf32, #tpu.memory_space<vmem>>, vector<8x3xf32>
      tpu.vector_store %arg3[%c0_10, %c0_11], %31 {strides = array<i32>} : memref<8x3xf32, #tpu.memory_space<vmem>>, vector<8x3xf32>,
    } else {
    }
    %c0 = arith.constant 0 : index
    %c0_1 = arith.constant 0 : index
    %3 = vector.load %arg2[%c0, %c0_1] : memref<32x3xf32, #tpu.memory_space<vmem>>, vector<32x3xf32>
    %4 = math.absf %3 : vector<32x3xf32>
    %cst = arith.constant 0.000000e+00 : f32
    %5 = vector.broadcast %cst : f32 to vector<32x3xf32>
    %6 = arith.subf %5, %4 : vector<32x3xf32>
    %7 = math.exp %6 : vector<32x3xf32>
    %cst_2 = arith.constant 0.000000e+00 : f32
    %8 = vector.broadcast %cst_2 : f32 to vector<32x3xf32>
    %9 = arith.maximumf %3, %8 : vector<32x3xf32>
    %10 = math.log1p %7 : vector<32x3xf32>
    %11 = arith.addf %9, %10 : vector<32x3xf32>
    %cst_3 = arith.constant 1.000000e+00 : f32
    %12 = vector.broadcast %cst_3 : f32 to vector<32x3xf32>
    %13 = arith.addf %12, %7 : vector<32x3xf32>
    %14 = tpu.reciprocal %13 {approx = true} : vector<32x3xf32> -> vector<32x3xf32>
    %cst_4 = arith.constant 0.000000e+00 : f32
    %15 = vector.broadcast %cst_4 : f32 to vector<32x3xf32>
    %16 = arith.cmpf oge, %3, %15 : vector<32x3xf32>
    %17 = arith.mulf %7, %14 : vector<32x3xf32>
    %18 = arith.select %16, %14, %17 : vector<32x3xi1>, vector<32x3xf32>
    %19 = arith.mulf %18, %18 : vector<32x3xf32>
    %20 = arith.mulf %19, %11 : vector<32x3xf32>
    %21 = vector.extract_strided_slice %20 {offsets = [0, 0], sizes = [8, 3], strides = [1, 1]} : vector<32x3xf32> to vector<8x3xf32>
    %22 = vector.extract_strided_slice %20 {offsets = [8, 0], sizes = [8, 3], strides = [1, 1]} : vector<32x3xf32> to vector<8x3xf32>
    %23 = vector.extract_strided_slice %20 {offsets = [16, 0], sizes = [8, 3], strides = [1, 1]} : vector<32x3xf32> to vector<8x3xf32>
    %24 = vector.extract_strided_slice %20 {offsets = [24, 0], sizes = [8, 3], strides = [1, 1]} : vector<32x3xf32> to vector<8x3xf32>
    %25 = arith.addf %21, %22 : vector<8x3xf32>
    %26 = arith.addf %23, %24 : vector<8x3xf32>
    %27 = arith.addf %25, %26 : vector<8x3xf32>
    %c0_5 = arith.constant 0 : index
    %c0_6 = arith.constant 0 : index
    %28 = vector.load %arg3[%c0_5, %c0_6] : memref<8x3xf32, #tpu.memory_space<vmem>>, vector<8x3xf32>
    %29 = arith.addf %28, %27 : vector<8x3xf32>
    %c0_7 = arith.constant 0 : index
    %c0_8 = arith.constant 0 : index
    %30 = vector.load %arg3[%c0_7, %c0_8] : memref<8x3xf32, #tpu.memory_space<vmem>>, vector<8x3xf32>
    tpu.vector_store %arg3[%c0_7, %c0_8], %29 {strides = array<i32>} : memref<8x3xf32, #tpu.memory_space<vmem>>, vector<8x3xf32>,
    return
  }
  func.func @transform_0(%arg0: i32, %arg1: i32) -> (i32, i32) {
    %c1_i32 = arith.constant 1 : i32
    %0 = arith.muli %arg0, %c1_i32 : i32
    %1 = arith.addi %0, %arg1 : i32
    %c0_i32 = arith.constant 0 : i32
    %c0_i32_0 = arith.constant 0 : i32
    return %1, %c0_i32 : i32, i32
  }
  func.func @transform_1(%arg0: i32, %arg1: i32) -> (i32, i32) {
    %c0_i32 = arith.constant 0 : i32
    %c0_i32_0 = arith.constant 0 : i32
    return %arg0, %c0_i32 : i32, i32
  }
}

</mosaic_0001>

<llo_original>
// kernel: tpu_custom_call.1
$region0: #{tpu_custom_call.1}
  #allocation0 [shape = 'u32[]', space=smem, size = 0x4, offset = 0x4, fixed_abs, tag = 'smem constant byte address 0x4 - core index']
  #allocation1 [shape = 'u32[144,128]{1,0:T(1,128)}', space=vmem, size = 0x12000, scoped, tag = 'internal scratch']
  %s0 = inlined_call_operand.vmem [shape: f32[32,3], index: 0, kind: input, shape index: {}]
  %s1 = inlined_call_operand.vmem [shape: f32[8,3], index: 1, kind: output, shape index: {}]
  %s2 = sld [smem:[#allocation0]]
  $region18: #{tpu_custom_call.1} parent=0
    _
  %s4 = ssub.s32 1, %s2
  %s5 = scalar_select 0, %s4, %s2
  // Predicated region
  $region2: #{tpu_custom_call.1} parent=0 // pred_check
    _
  $region3: #{tpu_custom_call.1} parent=0 // pred_check_branch
    %7 = sbr.rel (0) target = $region5
  $region4: #{tpu_custom_call.1} parent=0 // pred_region
    %s8 = sadd.s32 0, 0
    %s9 = smul.u32 4, %s8
    %p10 = scmp.lt.s32.totalorder %s9, 3
    %s11 = scalar_select %p10, %s9, 3
    %s12 = smul.addr %s11, 8
    %s13 = scalar_lea.vmem %s0, %s12
    %s14 = sadd.s32 0, 0
    %s15 = smul.u32 4, %s14
  $region5: #{tpu_custom_call.1} parent=0 // pred_fallthru
    _
  %s16 = sadd.s32 0, 0
  %s17 = smul.u32 4, %s16
  %p18 = scmp.lt.s32.totalorder %s17, 3
  %s19 = scalar_select %p18, %s17, 3
  %s20 = smul.addr %s19, 8
  %s21 = scalar_lea.vmem %s0, %s20
  %s22 = sadd.s32 0, 0
  %s23 = smul.u32 4, %s22
  %p24 = scmp.lt.s32.totalorder %s23, 3
  %s25 = scalar_select %p24, %s23, 3
  %s26 = smul.addr %s25, 8
  %s27 = scalar_lea.vmem %s0, %s26
  %s28 = sadd.s32 0, 0
  %s29 = smul.u32 4, %s28
  %p30 = scmp.eq.s32.totalorder 0, 0
  // Predicated region
  $region6: #{tpu_custom_call.1} parent=0 // pred_check
    %p31 = pneg %p30
  $region7: #{tpu_custom_call.1} parent=0 // pred_check_branch
    %33 = sbr.rel (%p31) target = $region9
  $region8: #{tpu_custom_call.1} parent=0 // pred_region
    %vm34 = vcmask 23552
    %35 = vst.msk [vmem:[%s1] sm:$0xff] %vm34, 0.0
  $region9: #{tpu_custom_call.1} parent=0 // pred_fallthru
    _
  %v36 = vld [vmem:[%s27] sm:$0xff]
  %v37 = vld [vmem:[%s27 + $0x8] sm:$0xff]
  %v38 = vld [vmem:[%s27 + $0x10] sm:$0xff]
  %v39 = vld [vmem:[%s27 + $0x18] sm:$0xff]
  %v40 = vand.u32 2147483647, %v36
  %v41 = vand.u32 2147483647, %v37
  %v42 = vand.u32 2147483647, %v38
  %v43 = vand.u32 2147483647, %v39
  %v44 = vsub.f32 0.0, %v40
  %v45 = vsub.f32 0.0, %v41
  %v46 = vsub.f32 0.0, %v42
  %v47 = vsub.f32 0.0, %v43
  %v48 = vmul.f32 %v44, 1.442695
  %v49 = vpow.pop %v48
  %v50 = vmul.f32 %v45, 1.442695
  %v51 = vpow.pop %v50
  %v52 = vmul.f32 %v46, 1.442695
  %v53 = vpow.pop %v52
  %v54 = vmul.f32 %v47, 1.442695
  %v55 = vpow.pop %v54
  %v56 = vmax.f32 %v36, 0.0
  %v57 = vmax.f32 %v37, 0.0
  %v58 = vmax.f32 %v38, 0.0
  %v59 = vmax.f32 %v39, 0.0
  %v60 = vadd.f32 %v49, 1.0
  %v61 = vlog2.pop %v60
  %v62 = vmul.f32 %v61, 0.6931472
  %v63 = vmul.f32 -0.5, %v49
  %v64 = vadd.f32 %v63, 1.0
  %v65 = vmul.f32 %v64, %v49
  %v66 = vand.u32 2147483647, %v49
  %vm67 = vcmp.lt.f32.partialorder %v66, 0.0004427343
  %v68 = vsel %vm67, %v65, %v62
  %v69 = vadd.f32 %v51, 1.0
  %v70 = vlog2.pop %v69
  %v71 = vmul.f32 %v70, 0.6931472
  %v72 = vmul.f32 -0.5, %v51
  %v73 = vadd.f32 %v72, 1.0
  %v74 = vmul.f32 %v73, %v51
  %v75 = vand.u32 2147483647, %v51
  %vm76 = vcmp.lt.f32.partialorder %v75, 0.0004427343
  %v77 = vsel %vm76, %v74, %v71
  %v78 = vadd.f32 %v53, 1.0
  %v79 = vlog2.pop %v78
  %v80 = vmul.f32 %v79, 0.6931472
  %v81 = vmul.f32 -0.5, %v53
  %v82 = vadd.f32 %v81, 1.0
  %v83 = vmul.f32 %v82, %v53
  %v84 = vand.u32 2147483647, %v53
  %vm85 = vcmp.lt.f32.partialorder %v84, 0.0004427343
  %v86 = vsel %vm85, %v83, %v80
  %v87 = vadd.f32 %v55, 1.0
  %v88 = vlog2.pop %v87
  %v89 = vmul.f32 %v88, 0.6931472
  %v90 = vmul.f32 -0.5, %v55
  %v91 = vadd.f32 %v90, 1.0
  %v92 = vmul.f32 %v91, %v55
  %v93 = vand.u32 2147483647, %v55
  %vm94 = vcmp.lt.f32.partialorder %v93, 0.0004427343
  %v95 = vsel %vm94, %v92, %v89
  %v96 = vadd.f32 %v56, %v68
  %v97 = vadd.f32 %v57, %v77
  %v98 = vadd.f32 %v58, %v86
  %v99 = vadd.f32 %v59, %v95
  %v100 = vadd.f32 %v49, 1.0
  %v101 = vadd.f32 %v51, 1.0
  %v102 = vadd.f32 %v53, 1.0
  %v103 = vadd.f32 %v55, 1.0
  %v104 = vrcp.pop %v100
  %v105 = vrcp.pop %v101
  %v106 = vrcp.pop %v102
  %v107 = vrcp.pop %v103
  %vm108 = vcmp.ge.f32.partialorder %v36, 0.0
  %vm109 = vcmp.ge.f32.partialorder %v37, 0.0
  %vm110 = vcmp.ge.f32.partialorder %v38, 0.0
  %vm111 = vcmp.ge.f32.partialorder %v39, 0.0
  %v112 = vmul.f32 %v49, %v104
  %v113 = vmul.f32 %v51, %v105
  %v114 = vmul.f32 %v53, %v106
  %v115 = vmul.f32 %v55, %v107
  %v116 = vsel %vm108, %v104, %v112
  %v117 = vsel %vm109, %v105, %v113
  %v118 = vsel %vm110, %v106, %v114
  %v119 = vsel %vm111, %v107, %v115
  %v120 = vmul.f32 %v116, %v116
  %v121 = vmul.f32 %v117, %v117
  %v122 = vmul.f32 %v118, %v118
  %v123 = vmul.f32 %v119, %v119
  %v124 = vmul.f32 %v120, %v96
  %v125 = vmul.f32 %v121, %v97
  %v126 = vmul.f32 %v122, %v98
  %v127 = vmul.f32 %v123, %v99
  %v128 = vadd.f32 %v124, %v125
  %v129 = vadd.f32 %v126, %v127
  %v130 = vadd.f32 %v128, %v129
  %v131 = vld [vmem:[%s1] sm:$0xff]
  %v132 = vadd.f32 %v131, %v130
  %vm133 = vcmask 23552
  %134 = vst.msk [vmem:[%s1] sm:$0xff] %vm133, %v132
  // Predicated region
  $region10: #{tpu_custom_call.1} parent=0 // pred_check
    _
  $region11: #{tpu_custom_call.1} parent=0 // pred_check_branch
    %136 = sbr.rel (0) target = $region13
  $region12: #{tpu_custom_call.1} parent=0 // pred_region
    _
  $region13: #{tpu_custom_call.1} parent=0 // pred_fallthru
    _
  // Predicated region
  $region14: #{tpu_custom_call.1} parent=0 // pred_check
    _
  $region15: #{tpu_custom_call.1} parent=0 // pred_check_branch
    %138 = sbr.rel (0) target = $region17
  $region16: #{tpu_custom_call.1} parent=0 // pred_region
    _
  $region17: #{tpu_custom_call.1} parent=0 // pred_fallthru
    _

</llo_original>
